<compile_context>
chip_gen: v6e
topology: v6e:2x2x1
jax: 0.10.0
libtpu: 0.0.40
codegen_flags: <defaults>
</compile_context>

<pallas_src>
import jax
import jax.numpy as jnp
from jax.experimental import pallas as pl
from jax.experimental.pallas import tpu as pltpu


def _focal_pow(one_minus_p, probs, gamma: float):
    """Static specialization of (1 - p) ** gamma."""
    g_int = int(gamma)
    if float(g_int) == float(gamma) and 0 <= g_int <= 4:
        if g_int == 0:
            return jnp.ones_like(one_minus_p)
        out = one_minus_p
        for _ in range(g_int - 1):          # gamma=2 -> a single VPU multiply
            out = out * one_minus_p
        return out
    # General float gamma: single log1p+exp EUP chain, safe at p -> 0 and p -> 1.
    return jnp.exp(gamma * jnp.log1p(-probs))


def _make_focal_loss_kernel(n_rows: int, tile_n: int, gamma: float,
                            size_average: bool):
    def kernel(logits_ref, targets_ref, alpha_ref, out_ref, acc_ref):
        i = pl.program_id(0)

        @pl.when(i == 0)
        def _init():
            acc_ref[0] = jnp.float32(0.0)

        x = logits_ref[...].astype(jnp.float32)   # (TN, C) cast on-chip
        t = targets_ref[...]                      # (TN, 1) int32
        a = alpha_ref[...].astype(jnp.float32)    # (1, C)

        tn, c = x.shape

        # log-softmax gather (no full softmax, no divide over N*C).
        m = jnp.max(x, axis=1, keepdims=True)                          # (TN,1)
        xs = x - m                                                     # (TN,C)
        lse = jnp.log(jnp.sum(jnp.exp(xs), axis=1, keepdims=True))     # (TN,1)

        # one-hot class mask (equivalent of scatter_(1, ids, 1.0)); reused for
        # both the target-logit gather and the alpha gather in one pass.
        col = jax.lax.broadcasted_iota(jnp.int32, (tn, c), 1)
        mask = (col == t).astype(jnp.float32)                          # (TN,C)
        x_t = jnp.sum(xs * mask, axis=1, keepdims=True)                # (TN,1)
        alpha_n = jnp.sum(a * mask, axis=1, keepdims=True)             # (TN,1)

        log_p = x_t - lse                  # log softmax(x)[target], finite
        probs = jnp.exp(log_p)
        focal = _focal_pow(1.0 - probs, probs, gamma)

        per_row = -alpha_n * focal * log_p                             # (TN,1)

        # Mask tail-padding rows of a partial last tile.
        row = jax.lax.broadcasted_iota(jnp.int32, (tn, 1), 0) + i * tile_n
        per_row = jnp.where(row < n_rows, per_row, 0.0)

        acc_ref[0] += jnp.sum(per_row)

        @pl.when(i == pl.num_programs(0) - 1)
        def _finish():
            total = acc_ref[0]
            if size_average:
                total = total / jnp.float32(n_rows)
            out_ref[0, 0] = total

    return kernel


def focal_loss(inputs, targets, alpha=None, gamma=2.0, size_average=True,
               tile_n=None):
    """inputs: (N, C) float logits (any float dtype); targets: (N,) int ids."""
    n, c = inputs.shape
    if alpha is None:
        alpha = jnp.ones((c,), dtype=jnp.float32)   # torch.ones(class_num, 1)
    alpha2d = jnp.asarray(alpha, dtype=jnp.float32).reshape(1, c)
    targets2d = targets.reshape(n, 1).astype(jnp.int32)

    if tile_n is None:
        # Single block for small N, else a row tile that keeps the double
        # buffer well inside scoped VMEM on v5e/v6e/v7x (re-derive for huge C).
        tile_n = n if n <= 1024 else 512
    grid_n = pl.cdiv(n, tile_n)

    kernel = _make_focal_loss_kernel(int(n), int(tile_n), float(gamma),
                                     bool(size_average))

    out = pl.pallas_call(
        kernel,
        grid=(grid_n,),
        out_shape=jax.ShapeDtypeStruct((1, 1), jnp.float32),
        in_specs=[
            pl.BlockSpec((tile_n, c), lambda i: (i, 0)),   # logits, native dtype
            pl.BlockSpec((tile_n, 1), lambda i: (i, 0)),   # targets
            pl.BlockSpec((1, c), lambda i: (0, 0)),        # alpha (replicated)
        ],
        out_specs=pl.BlockSpec(memory_space=pltpu.SMEM),   # scalar result in SMEM
        scratch_shapes=[pltpu.SMEM((1,), jnp.float32)],    # running sum
        compiler_params=pltpu.CompilerParams(
            dimension_semantics=("arbitrary",)),           # sequential reduction
    )(inputs, targets2d, alpha2d)

    return out[0, 0]


def focal_loss_ref(inputs, targets, alpha=None, gamma=2.0, size_average=True):
    n, c = inputs.shape
    if alpha is None:
        alpha = jnp.ones((c,), dtype=jnp.float32)
    alpha = jnp.asarray(alpha, dtype=jnp.float32).reshape(-1)
    p = jax.nn.softmax(inputs.astype(jnp.float32), axis=1)
    probs = p[jnp.arange(n), targets]
    a = alpha[targets]
    bl = -a * (1.0 - probs) ** gamma * jnp.log(probs)
    return jnp.mean(bl) if size_average else jnp.sum(bl)


if __name__ == "__main__":
    key = jax.random.PRNGKey(0)
    k1, k2, k3, k4 = jax.random.split(key, 4)

    # Test 1: basic f32, single tile, defaults (gamma=2, mean).
    N, C = 8, 16
    logits = jax.random.normal(k1, (N, C), dtype=jnp.float32)
    targets = jax.random.randint(k2, (N,), 0, C, dtype=jnp.int32)
    out = jax.block_until_ready(focal_loss(logits, targets))
    ref = focal_loss_ref(logits, targets)
    assert jnp.allclose(out, ref, rtol=1e-5, atol=1e-5), (out, ref)

    # Test 2: tiled grid with a partial last tile, custom alpha, sum reduction,
    # non-integer gamma (exercises accumulator, tail mask, general pow path).
    N2, C2 = 20, 16
    logits2 = 3.0 * jax.random.normal(k3, (N2, C2), dtype=jnp.float32)
    targets2 = jax.random.randint(k4, (N2,), 0, C2, dtype=jnp.int32)
    alpha2 = jnp.linspace(0.5, 2.0, C2, dtype=jnp.float32)
    out2 = jax.block_until_ready(
        focal_loss(logits2, targets2, alpha=alpha2, gamma=1.5,
                   size_average=False, tile_n=8))
    ref2 = focal_loss_ref(logits2, targets2, alpha=alpha2, gamma=1.5,
                          size_average=False)
    assert jnp.allclose(out2, ref2, rtol=1e-5, atol=1e-5), (out2, ref2)

    # Test 3: bf16 logits stay bf16 across the HBM boundary (cast on-chip).
    logits_bf16 = logits.astype(jnp.bfloat16)
    out3 = jax.block_until_ready(focal_loss(logits_bf16, targets))
    ref3 = focal_loss_ref(logits_bf16.astype(jnp.float32), targets)
    assert jnp.allclose(out3, ref3, rtol=2e-2, atol=2e-2), (out3, ref3)

    print("KERNEL_OK")
</pallas_src>

<mosaic_0001>
module attributes {stable_mosaic.version = 11 : i64} {
  func.func @kernel(%arg0: i32, %arg1: memref<8x16xf32, #tpu.memory_space<vmem>>, %arg2: memref<8x1xi32, #tpu.memory_space<vmem>>, %arg3: memref<1x16xf32, #tpu.memory_space<vmem>>, %arg4: memref<1x1xf32, #tpu.memory_space<smem>>, %arg5: memref<1xf32, #tpu.memory_space<smem>>) attributes {dimension_semantics = [#tpu.dimension_semantics<arbitrary>], iteration_bounds = array<i64: 1>, scalar_prefetch = 0 : i64, scratch_operands = 1 : i64, tpu.core_type = #tpu.core_type<tc>, window_params = [{transform_indices = @transform_0, window_bounds = array<i64: 8, 16>}, {transform_indices = @transform_1, window_bounds = array<i64: 8, 1>}, {pipeline_mode = #tpu.pipeline_mode<synchronous>, transform_indices = @transform_2, window_bounds = array<i64: 1, 16>}, {transform_indices = @transform_3, window_bounds = array<i64: 1, 1>}]} {
    %c0_i32 = arith.constant 0 : i32
    %0 = arith.cmpi eq, %arg0, %c0_i32 : i32
    %1 = arith.extui %0 : i1 to i32
    %c0_i32_0 = arith.constant 0 : i32
    %2 = arith.cmpi ne, %1, %c0_i32_0 : i32
    scf.if %2 {
      %cst_18 = arith.constant 0.000000e+00 : f32
      %c0_19 = arith.constant 0 : index
      %53 = memref.load %arg5[%c0_19] : memref<1xf32, #tpu.memory_space<smem>>
      memref.store %cst_18, %arg5[%c0_19] : memref<1xf32, #tpu.memory_space<smem>>
    } else {
    }
    %c0 = arith.constant 0 : index
    %c0_1 = arith.constant 0 : index
    %3 = vector.load %arg1[%c0, %c0_1] : memref<8x16xf32, #tpu.memory_space<vmem>>, vector<8x16xf32>
    %c0_2 = arith.constant 0 : index
    %c0_3 = arith.constant 0 : index
    %4 = vector.load %arg2[%c0_2, %c0_3] : memref<8x1xi32, #tpu.memory_space<vmem>>, vector<8x1xi32>
    %c0_4 = arith.constant 0 : index
    %c0_5 = arith.constant 0 : index
    %5 = vector.load %arg3[%c0_4, %c0_5] : memref<1x16xf32, #tpu.memory_space<vmem>>, vector<1x16xf32>
    %cst = arith.constant dense<0xFF800000> : vector<8xf32>
    %6 = vector.multi_reduction <maximumf>, %3, %cst [1] : vector<8x16xf32> to vector<8xf32>
    %7 = vector.shape_cast %6 : vector<8xf32> to vector<8x1xf32>
    %8 = vector.broadcast %7 : vector<8x1xf32> to vector<8x16xf32>
    %9 = arith.subf %3, %8 : vector<8x16xf32>
    %10 = math.exp %9 : vector<8x16xf32>
    %cst_6 = arith.constant dense<0.000000e+00> : vector<8xf32>
    %11 = vector.multi_reduction <add>, %10, %cst_6 [1] : vector<8x16xf32> to vector<8xf32>
    %12 = vector.shape_cast %11 : vector<8xf32> to vector<8x1xf32>
    %13 = math.log %12 : vector<8x1xf32>
    %14 = tpu.iota {dimensions = array<i32: 1>} : vector<8x16xi32>
    %15 = vector.broadcast %4 : vector<8x1xi32> to vector<8x16xi32>
    %16 = arith.cmpi eq, %14, %15 : vector<8x16xi32>
    %17 = arith.extui %16 : vector<8x16xi1> to vector<8x16xi32>
    %18 = arith.sitofp %17 : vector<8x16xi32> to vector<8x16xf32>
    %19 = arith.mulf %9, %18 : vector<8x16xf32>
    %cst_7 = arith.constant dense<0.000000e+00> : vector<8xf32>
    %20 = vector.multi_reduction <add>, %19, %cst_7 [1] : vector<8x16xf32> to vector<8xf32>
    %21 = vector.shape_cast %20 : vector<8xf32> to vector<8x1xf32>
    %22 = vector.broadcast %5 : vector<1x16xf32> to vector<8x16xf32>
    %23 = arith.mulf %22, %18 : vector<8x16xf32>
    %cst_8 = arith.constant dense<0.000000e+00> : vector<8xf32>
    %24 = vector.multi_reduction <add>, %23, %cst_8 [1] : vector<8x16xf32> to vector<8xf32>
    %25 = vector.shape_cast %24 : vector<8xf32> to vector<8x1xf32>
    %26 = arith.subf %21, %13 : vector<8x1xf32>
    %27 = math.exp %26 : vector<8x1xf32>
    %cst_9 = arith.constant 1.000000e+00 : f32
    %28 = vector.broadcast %cst_9 : f32 to vector<8x1xf32>
    %29 = arith.subf %28, %27 : vector<8x1xf32>
    %30 = arith.mulf %29, %29 : vector<8x1xf32>
    %cst_10 = arith.constant 0.000000e+00 : f32
    %31 = vector.broadcast %cst_10 : f32 to vector<8x1xf32>
    %32 = arith.subf %31, %25 : vector<8x1xf32>
    %33 = arith.mulf %32, %30 : vector<8x1xf32>
    %34 = arith.mulf %33, %26 : vector<8x1xf32>
    %35 = tpu.iota {dimensions = array<i32: 0>} : vector<8x1xi32>
    %c8_i32 = arith.constant 8 : i32
    %36 = arith.muli %arg0, %c8_i32 : i32
    %37 = vector.broadcast %36 : i32 to vector<8x1xi32>
    %38 = arith.addi %35, %37 : vector<8x1xi32>
    %c8_i32_11 = arith.constant 8 : i32
    %39 = vector.broadcast %c8_i32_11 : i32 to vector<8x1xi32>
    %40 = arith.cmpi slt, %38, %39 : vector<8x1xi32>
    %cst_12 = arith.constant 0.000000e+00 : f32
    %41 = vector.broadcast %cst_12 : f32 to vector<8x1xf32>
    %42 = arith.select %40, %34, %41 : vector<8x1xi1>, vector<8x1xf32>
    %c0_13 = arith.constant 0 : index
    %43 = memref.load %arg5[%c0_13] : memref<1xf32, #tpu.memory_space<smem>>
    %44 = vector.shape_cast %42 : vector<8x1xf32> to vector<1x8x1xf32>
    %cst_14 = arith.constant dense<0.000000e+00> : vector<1xf32>
    %45 = vector.multi_reduction <add>, %44, %cst_14 [1, 2] : vector<1x8x1xf32> to vector<1xf32>
    %46 = vector.shape_cast %45 : vector<1xf32> to vector<1x1x1xf32>
    %47 = vector.extract %46[0, 0, 0] : f32 from vector<1x1x1xf32>
    %48 = arith.addf %43, %47 : f32
    %c0_15 = arith.constant 0 : index
    %49 = memref.load %arg5[%c0_15] : memref<1xf32, #tpu.memory_space<smem>>
    memref.store %48, %arg5[%c0_15] : memref<1xf32, #tpu.memory_space<smem>>
    %c0_i32_16 = arith.constant 0 : i32
    %50 = arith.cmpi eq, %arg0, %c0_i32_16 : i32
    %51 = arith.extui %50 : i1 to i32
    %c0_i32_17 = arith.constant 0 : i32
    %52 = arith.cmpi ne, %51, %c0_i32_17 : i32
    scf.if %52 {
      %c0_18 = arith.constant 0 : index
      %53 = memref.load %arg5[%c0_18] : memref<1xf32, #tpu.memory_space<smem>>
      %cst_19 = arith.constant 8.000000e+00 : f32
      %54 = arith.divf %53, %cst_19 : f32
      %c0_20 = arith.constant 0 : index
      %c0_21 = arith.constant 0 : index
      %55 = memref.load %arg4[%c0_20, %c0_21] : memref<1x1xf32, #tpu.memory_space<smem>>
      memref.store %54, %arg4[%c0_20, %c0_21] : memref<1x1xf32, #tpu.memory_space<smem>>
    } else {
    }
    return
  }
  func.func @transform_0(%arg0: i32) -> (i32, i32) {
    %c0_i32 = arith.constant 0 : i32
    %c0_i32_0 = arith.constant 0 : i32
    return %arg0, %c0_i32 : i32, i32
  }
  func.func @transform_1(%arg0: i32) -> (i32, i32) {
    %c0_i32 = arith.constant 0 : i32
    %c0_i32_0 = arith.constant 0 : i32
    return %arg0, %c0_i32 : i32, i32
  }
  func.func @transform_2(%arg0: i32) -> (i32, i32) {
    %c0_i32 = arith.constant 0 : i32
    %c0_i32_0 = arith.constant 0 : i32
    %c0_i32_1 = arith.constant 0 : i32
    return %c0_i32, %c0_i32_0 : i32, i32
  }
  func.func @transform_3(%arg0: i32) -> (i32, i32) {
    %c0_i32 = arith.constant 0 : i32
    %c0_i32_0 = arith.constant 0 : i32
    %c0_i32_1 = arith.constant 0 : i32
    return %c0_i32, %c0_i32_0 : i32, i32
  }
}

</mosaic_0001>

<llo_original>
// kernel: tpu_custom_call.1
$region0: #{tpu_custom_call.1}
  #allocation0 [shape = 'u32[]', space=smem, size = 0x4, offset = 0x4, fixed_abs, tag = 'smem constant byte address 0x4 - core index']
  #allocation1 [shape = 'u32[144,128]{1,0:T(1,128)}', space=vmem, size = 0x12000, scoped, tag = 'internal scratch']
  #allocation2 [shape = 'f32[1]{0:T(128)}', space=smem, size = 0x200, scoped, tag = 'scratch operand']
  %s0 = inlined_call_operand.vmem [shape: f32[8,16], index: 0, kind: input, shape index: {}]
  %s1 = inlined_call_operand.vmem [shape: s32[8,1], index: 1, kind: input, shape index: {}]
  %s2 = inlined_call_operand.vmem [shape: f32[1,16], index: 2, kind: input, shape index: {}]
  %s3 = inlined_call_operand.hbm [shape: f32[1,1], index: 3, kind: output, shape index: {}]
  %s4 = sld [smem:[#allocation0]]
  $region30: #{tpu_custom_call.1} parent=0
    _
  %s6 = ssub.s32 1, %s4
  %s7 = scalar_select 0, %s6, %s4
  $region1: #{tpu_custom_call.1} parent=0
    #allocation3 [shape = 'u8[512]{0}', space=smem, size = 0x200, scoped, tag = 'output window, operand 0, single buffered']
    #allocation4 [shape = 's32[1]{0}', space=sflag, size = 0x4, scoped, tag = 'scoped memory for tpu_custom_call.1']
    %8 = vsyncpa [#allocation4], 0
    // Predicated region
    $region2: #{tpu_custom_call.1} parent=1 // pred_check
      _
    $region3: #{tpu_custom_call.1} parent=1 // pred_check_branch
      %10 = sbr.rel (0) target = $region5
    $region4: #{tpu_custom_call.1} parent=1 // pred_region
      _
    $region5: #{tpu_custom_call.1} parent=1 // pred_fallthru
      _
    // Predicated region
    $region6: #{tpu_custom_call.1} parent=1 // pred_check
      _
    $region7: #{tpu_custom_call.1} parent=1 // pred_check_branch
      %12 = sbr.rel (0) target = $region9
    $region8: #{tpu_custom_call.1} parent=1 // pred_region
      _
    $region9: #{tpu_custom_call.1} parent=1 // pred_fallthru
      _
    // Predicated region
    $region10: #{tpu_custom_call.1} parent=1 // pred_check
      _
    $region11: #{tpu_custom_call.1} parent=1 // pred_check_branch
      %14 = sbr.rel (0) target = $region13
    $region12: #{tpu_custom_call.1} parent=1 // pred_region
      _
    $region13: #{tpu_custom_call.1} parent=1 // pred_fallthru
      _
    %p15 = scmp.eq.s32.totalorder 0, 0
    // Predicated region
    $region14: #{tpu_custom_call.1} parent=1 // pred_check
      %p16 = pneg %p15
    $region15: #{tpu_custom_call.1} parent=1 // pred_check_branch
      %18 = sbr.rel (%p16) target = $region17
    $region16: #{tpu_custom_call.1} parent=1 // pred_region
      %s19 = scalar_lea.smem [#allocation2], 0
      %20 = sst [smem:[%s19]] 0.0
    $region17: #{tpu_custom_call.1} parent=1 // pred_fallthru
      _
    %v21 = vld [vmem:[%s0] sm:$0xff]
    %v22 = vld [vmem:[%s1] sm:$0xff]
    %v23 = vld [vmem:[%s2] sm:$0x1]
    %vm24 = vcmask 130048
    %v25 = vsel %vm24, %v21, -inf
    %26 = vmax.xlane.f32.xlu0 %v25
    %v27 = vpop.xlane.xlu0 %26
    %v28 = vsub.f32 %v21, %v27
    %v29 = vmul.f32 %v28, 1.442695
    %v30 = vpow.pop %v29
    %v31 = vsel %vm24, %v30, 0.0
    %32 = vadd.xlane.f32.xlu0 %v31
    %v33 = vpop.xlane.xlu0 %32
    %v34 = vlog2.pop %v33
    %v35 = vmul.f32 %v34, 0.6931472
    %v36 = vlaneseq
    %v37 = vand.u32 %v36, 127
    %38 = vset.pattern.permute.xlu0 0
    %39 = vperm.xlu0 %38, %v22
    %v40 = vpop.permute.xlu0 %39
    %vm41 = vcmp.eq.s32.totalorder %v37, %v40
    %v42 = vsel %vm41, 1, 0
    %v43 = vcvt.s32.f32 %v42
    %v44 = vmul.f32 %v28, %v43
    %v45 = vsel %vm24, %v44, 0.0
    %46 = vadd.xlane.f32.xlu0 %v45
    %v47 = vpop.xlane.xlu0 %46
    %v49 = vlaneseq
    %v50 = vshrl.u32 %v49, 7
    %v51 = vsub.s32 0, %v50
    %v52 = vrot.slane %v23, %v51
    %v54 = vmul.f32 %v52, %v43
    %v55 = vsel %vm24, %v54, 0.0
    %56 = vadd.xlane.f32.xlu0 %v55
    %v57 = vpop.xlane.xlu0 %56
    %v58 = vsub.f32 %v47, %v35
    %v59 = vmul.f32 %v58, 1.442695
    %v60 = vpow.pop %v59
    %v61 = vsub.f32 1.0, %v60
    %v62 = vmul.f32 %v61, %v61
    %v63 = vsub.f32 0.0, %v57
    %v64 = vmul.f32 %v63, %v62
    %v65 = vmul.f32 %v64, %v58
    %v66 = vlaneseq
    %v67 = vshrl.u32 %v66, 7
    %s68 = smul.u32 0, 8
    %v69 = vstv %s68
    %v70 = vadd.s32 %v67, %v69
    %vm71 = vcmp.lt.s32.totalorder %v70, 8
    %v72 = vsel %vm71, %v65, 0.0
    %s73 = sld [smem:[#allocation2]]
    %vm74 = vcmask 7168
    %v75 = vsel %vm74, %v72, 0.0
    %76 = vadd.xlane.f32.xlu0 %v75
    %v77 = vpop.xlane.xlu0 %76
    %v78 = vrot.slane %v77, 4
    %v79 = vadd.f32 %v77, %v78
    %v80 = vrot.slane %v79, 2
    %v81 = vadd.f32 %v79, %v80
    %v82 = vrot.slane %v81, 1
    %v83 = vadd.f32 %v81, %v82
    %s84 = vtos %v83
    %s85 = sadd.f32 %s73, %s84
    %s86 = scalar_lea.smem [#allocation2], 0
    %87 = sst [smem:[%s86]] %s85
    // Predicated region
    $region18: #{tpu_custom_call.1} parent=1 // pred_check
      %p88 = pneg %p15
    $region19: #{tpu_custom_call.1} parent=1 // pred_check_branch
      %90 = sbr.rel (%p88) target = $region21
    $region20: #{tpu_custom_call.1} parent=1 // pred_region
      %s91 = sld [smem:[#allocation2]]
      %v92 = vrcp.pop 8.0
      %s93 = vtos %v92
      %s94 = smul.f32 %s91, %s93
      %s95 = scalar_lea.smem [#allocation3], 0
      %96 = sst [smem:[%s95]] %s94
    $region21: #{tpu_custom_call.1} parent=1 // pred_fallthru
      _
    // Predicated region
    $region22: #{tpu_custom_call.1} parent=1 // pred_check
      _
    $region23: #{tpu_custom_call.1} parent=1 // pred_check_branch
      %98 = sbr.rel (0) target = $region25
    $region24: #{tpu_custom_call.1} parent=1 // pred_region
      %s100 = ssub.s32 16, 16
      %101 = vsyncadd [#allocation4], %s100
      %104 = dma.smem_to_hbm [#allocation3], 16, %s3, [#allocation4]
    $region25: #{tpu_custom_call.1} parent=1 // pred_fallthru
      _
    // Predicated region
    $region26: #{tpu_custom_call.1} parent=1 // pred_check
      _
    $region27: #{tpu_custom_call.1} parent=1 // pred_check_branch
      %106 = sbr.rel (0) target = $region29
    $region28: #{tpu_custom_call.1} parent=1 // pred_region
      %107 = dma.done [#allocation4], 16
    $region29: #{tpu_custom_call.1} parent=1 // pred_fallthru
      _
    %108 = sfence
    %109 = vsyncpa [#allocation4], 1

</llo_original>
